<compile_context>
chip_gen: v5e
topology: v5e:2x2
jax: 0.10.0
libtpu: 0.0.40
codegen_flags: <defaults>
</compile_context>

<pallas_src>
import functools

import jax
import jax.numpy as jnp
from jax.experimental import pallas as pl
from jax.experimental.pallas import tpu as pltpu

C_FEAT = 2048      # resnet50.fc.in_features
EMBED = 128        # embed_size (multiple of 128 -> lane-dense output stores)
LN_EPS = 1e-5      # torch.nn.LayerNorm default


def _encoder_head_kernel(f_ref, w_ref, p_ref, o_ref, *, nk, spatial, inv_s):
    """One grid step = one (batch-tile, channel-chunk) of the fused head.

    f_ref: (bt*S, tk)  channels-last feature chunk (lane-dense), f32
    w_ref: (E, tk)     Linear weight chunk, untransposed, bf16 (HBM traffic)
    p_ref: (3, E)      packed [bias; ln_gamma; ln_beta], f32
    o_ref: (bt, E)     f32 output; doubles as the resident reduction accumulator
    """
    bt, e = o_ref.shape

    # Pool folded into the MXU: full-rank (bt*S, tk) x (tk, E) matmul with f32
    # accumulation.  Weight streamed bf16 and upcast in VMEM so the activations
    # never drop below f32.
    partial = jax.lax.dot_general(
        f_ref[...], w_ref[...].astype(jnp.float32),
        dimension_numbers=(((1,), (1,)), ((), ())),
        preferred_element_type=jnp.float32)                      # (bt*S, E)
    # Spatial reduce -> (bt, E): cheap sublane add-tree on 128-wide vregs.
    partial = jnp.sum(partial.reshape(bt, spatial, e), axis=1)

    def finalize(acc):
        bias = p_ref[0:1, :]
        gamma = p_ref[1:2, :]
        beta = p_ref[2:3, :]
        y = acc * inv_s + bias               # fold avg-pool 1/S scale once
        mu = jnp.mean(y, axis=-1, keepdims=True)
        var = jnp.mean(jnp.square(y - mu), axis=-1, keepdims=True)
        yn = (y - mu) * jax.lax.rsqrt(var + LN_EPS)
        return (yn * gamma + beta).astype(o_ref.dtype)

    if nk == 1:
        # Single channel-reduction step: no zero-init, no read-modify-write.
        o_ref[...] = finalize(partial)
    else:
        k = pl.program_id(1)

        @pl.when(k == 0)
        def _():
            o_ref[...] = partial

        @pl.when(k > 0)
        def _():
            o_ref[...] += partial

        @pl.when(k == nk - 1)
        def _():
            o_ref[...] = finalize(o_ref[...])


def _pick_tk(C, bt, S, feat_bytes, w_bytes, E, budget=16 << 20):
    """Largest channel chunk whose double-buffered streamed tiles fit `budget`
    (v7x-safe: half of the 32 MiB default scoped VMEM).  On v5e/v6e (128 MiB
    VMEM) any realistic head shape keeps tk == C -> a single reduction step."""
    def streamed(t):
        return 2 * (bt * S * t * feat_bytes + E * t * w_bytes)

    tk = C
    while tk > 256 and streamed(tk) > budget and tk % 2 == 0:
        tk //= 2
    return tk


@functools.partial(jax.jit, static_argnames=("tk", "bt"))
def encoder_head(feat_nhwc, w, ln_params, *, tk=None, bt=None):
    """feat_nhwc: (B, Hf, Wf, C) channels-last trunk output (f32).
    w: (E, C) Linear weight (bf16 recommended for HBM streaming).
    ln_params: (3, E) packed [bias, gamma, beta] in f32.
    Returns (B, E) f32."""
    B, Hf, Wf, C = feat_nhwc.shape
    E = w.shape[0]
    S = Hf * Wf

    if bt is None:
        bt = B            # at real batch sizes pick a multiple of 8 so the
                          # (bt, E) output stores are unmasked vst
    assert B % bt == 0
    if tk is None:
        tk = _pick_tk(C, bt, S, feat_nhwc.dtype.itemsize, w.dtype.itemsize, E)
    assert C % tk == 0
    nk = C // tk

    # Free metadata reshape: channels-last trunk output -> (B*S, C) lane-dense.
    f = feat_nhwc.reshape(B * S, C)

    # Explicit scoped-VMEM request: double-buffered streamed operands + small
    # resident params/output + slack.  Clamped to the v7x physical ceiling.
    vmem_bytes = (2 * (bt * S * tk * feat_nhwc.dtype.itemsize
                       + E * tk * w.dtype.itemsize)
                  + 2 * (3 * E * 4 + bt * E * 4) + (2 << 20))
    vmem_limit = min(max(vmem_bytes, 16 << 20), 64 << 20)

    kernel = functools.partial(
        _encoder_head_kernel, nk=nk, spatial=S, inv_s=1.0 / S)

    return pl.pallas_call(
        kernel,
        out_shape=jax.ShapeDtypeStruct((B, E), jnp.float32),
        grid_spec=pl.GridSpec(
            grid=(B // bt, nk),                              # reduction axis last
            in_specs=[
                pl.BlockSpec((bt * S, tk), lambda b, k: (b, k)),   # features
                pl.BlockSpec((E, tk), lambda b, k: (0, k)),        # W chunk (E, tk)
                pl.BlockSpec((3, E), lambda b, k: (0, 0)),         # bias/gamma/beta
            ],
            out_specs=pl.BlockSpec((bt, E), lambda b, k: (b, 0)),
        ),
        compiler_params=pltpu.CompilerParams(
            # Batch tiles are independent (megacore "parallel" on v7x);
            # channel chunks are a resident-accumulator reduction ("arbitrary").
            dimension_semantics=("parallel", "arbitrary"),
            vmem_limit_bytes=vmem_limit,
        ),
    )(f, w, ln_params)


def reference_head(feat_nhwc, w, b, gamma, beta):
    """Pure-JAX f32 reference matching the PyTorch head semantics."""
    pooled = jnp.mean(feat_nhwc, axis=(1, 2))                   # avgpool + view
    y = pooled @ w.T + b                                        # nn.Linear
    mu = jnp.mean(y, axis=-1, keepdims=True)                    # nn.LayerNorm
    var = jnp.mean(jnp.square(y - mu), axis=-1, keepdims=True)
    return (y - mu) * jax.lax.rsqrt(var + LN_EPS) * gamma + beta


if __name__ == "__main__":
    key = jax.random.PRNGKey(0)
    k_img, k_feat, k_w, k_b = jax.random.split(key, 4)

    # Module input (NCHW images), kept for interface fidelity with the spec.
    images = jax.random.normal(k_img, (2, 3, 16, 16), dtype=jnp.float32)

    # TODO(synk): pretrained ResNet-50 trunk output stands in as a deterministic
    # random feature map of the correct shape, emitted channels-last (NHWC) as
    # XLA:TPU's conv pipeline naturally would.
    B, Hf, Wf = images.shape[0], 2, 2
    feat_nhwc = jax.random.normal(k_feat, (B, Hf, Wf, C_FEAT), dtype=jnp.float32)

    # Deterministic parameter init (nn.Linear default-style uniform; LN affine).
    bound = 1.0 / (C_FEAT ** 0.5)
    w = jax.random.uniform(k_w, (EMBED, C_FEAT), jnp.float32, -bound, bound)
    b = jax.random.uniform(k_b, (EMBED,), jnp.float32, -bound, bound)
    gamma = jnp.ones((EMBED,), jnp.float32)
    beta = jnp.zeros((EMBED,), jnp.float32)

    # Weight held bf16 (one-time cast; halves the dominant HBM stream); small
    # bias/LayerNorm params packed into one (3, E) f32 tensor.
    w_bf16 = w.astype(jnp.bfloat16)
    ln_params = jnp.stack([b, gamma, beta], axis=0)              # (3, E) f32

    # NOTE: at B=2, S=4 this call is launch-overhead bound; in a real pipeline
    # fuse the head into the trunk's last stage or batch many images per call.
    out = encoder_head(feat_nhwc, w_bf16, ln_params)
    out = jax.block_until_ready(out)

    ref = reference_head(feat_nhwc, w, b, gamma, beta)
    assert out.shape == (B, EMBED)
    # bf16 weight streaming (activations stay f32) -> slightly relaxed tolerance.
    assert jnp.allclose(out, ref, atol=2e-2, rtol=2e-2), "mismatch vs reference"

    print("KERNEL_OK")
</pallas_src>

<mosaic_0001>
module attributes {stable_mosaic.version = 11 : i64} {
  func.func @_encoder_head_kernel(%arg0: i32, %arg1: i32, %arg2: memref<8x2048xf32, #tpu.memory_space<vmem>>, %arg3: memref<128x2048xbf16, #tpu.memory_space<vmem>>, %arg4: memref<3x128xf32, #tpu.memory_space<vmem>>, %arg5: memref<2x128xf32, #tpu.memory_space<vmem>>) attributes {dimension_semantics = [#tpu.dimension_semantics<parallel>, #tpu.dimension_semantics<arbitrary>], iteration_bounds = array<i64: 1, 1>, scalar_prefetch = 0 : i64, scratch_operands = 0 : i64, tpu.core_type = #tpu.core_type<tc>, window_params = [{transform_indices = @transform_0, window_bounds = array<i64: 8, 2048>}, {transform_indices = @transform_1, window_bounds = array<i64: 128, 2048>}, {pipeline_mode = #tpu.pipeline_mode<synchronous>, transform_indices = @transform_2, window_bounds = array<i64: 3, 128>}, {transform_indices = @transform_3, window_bounds = array<i64: 2, 128>}]} {
    %c0 = arith.constant 0 : index
    %c0_0 = arith.constant 0 : index
    %0 = vector.load %arg2[%c0, %c0_0] : memref<8x2048xf32, #tpu.memory_space<vmem>>, vector<8x2048xf32>
    %c0_1 = arith.constant 0 : index
    %c0_2 = arith.constant 0 : index
    %1 = vector.load %arg3[%c0_1, %c0_2] : memref<128x2048xbf16, #tpu.memory_space<vmem>>, vector<128x2048xbf16>
    %2 = arith.extf %1 : vector<128x2048xbf16> to vector<128x2048xf32>
    %cst = arith.constant dense<0.000000e+00> : vector<8x128xf32>
    %3 = tpu.matmul %0, %2, %cst {dimension_numbers = #tpu.dot_dimension_numbers<[1], [1], [0], [0], [0, 0, 1, 0], [], []>} : vector<8x2048xf32>, vector<128x2048xf32>, vector<8x128xf32> -> vector<8x128xf32>
    %4 = vector.shape_cast %3 : vector<8x128xf32> to vector<2x4x128xf32>
    %cst_3 = arith.constant dense<0.000000e+00> : vector<2x128xf32>
    %5 = vector.multi_reduction <add>, %4, %cst_3 [1] : vector<2x4x128xf32> to vector<2x128xf32>
    %c0_4 = arith.constant 0 : index
    %c0_5 = arith.constant 0 : index
    %6 = vector.load %arg4[%c0_4, %c0_5] : memref<3x128xf32, #tpu.memory_space<vmem>>, vector<1x128xf32>
    %c1 = arith.constant 1 : index
    %c0_6 = arith.constant 0 : index
    %7 = vector.load %arg4[%c1, %c0_6] : memref<3x128xf32, #tpu.memory_space<vmem>>, vector<1x128xf32>
    %c2 = arith.constant 2 : index
    %c0_7 = arith.constant 0 : index
    %8 = vector.load %arg4[%c2, %c0_7] : memref<3x128xf32, #tpu.memory_space<vmem>>, vector<1x128xf32>
    %cst_8 = arith.constant 2.500000e-01 : f32
    %9 = vector.broadcast %cst_8 : f32 to vector<2x128xf32>
    %10 = arith.mulf %5, %9 : vector<2x128xf32>
    %11 = vector.broadcast %6 : vector<1x128xf32> to vector<2x128xf32>
    %12 = arith.addf %10, %11 : vector<2x128xf32>
    %cst_9 = arith.constant dense<0.000000e+00> : vector<2xf32>
    %13 = vector.multi_reduction <add>, %12, %cst_9 [1] : vector<2x128xf32> to vector<2xf32>
    %14 = vector.shape_cast %13 : vector<2xf32> to vector<2x1xf32>
    %cst_10 = arith.constant 1.280000e+02 : f32
    %15 = vector.broadcast %cst_10 : f32 to vector<2x1xf32>
    %16 = arith.divf %14, %15 : vector<2x1xf32>
    %17 = vector.broadcast %16 : vector<2x1xf32> to vector<2x128xf32>
    %18 = arith.subf %12, %17 : vector<2x128xf32>
    %19 = arith.mulf %18, %18 : vector<2x128xf32>
    %cst_11 = arith.constant dense<0.000000e+00> : vector<2xf32>
    %20 = vector.multi_reduction <add>, %19, %cst_11 [1] : vector<2x128xf32> to vector<2xf32>
    %21 = vector.shape_cast %20 : vector<2xf32> to vector<2x1xf32>
    %cst_12 = arith.constant 1.280000e+02 : f32
    %22 = vector.broadcast %cst_12 : f32 to vector<2x1xf32>
    %23 = arith.divf %21, %22 : vector<2x1xf32>
    %24 = vector.broadcast %16 : vector<2x1xf32> to vector<2x128xf32>
    %25 = arith.subf %12, %24 : vector<2x128xf32>
    %cst_13 = arith.constant 9.99999974E-6 : f32
    %26 = vector.broadcast %cst_13 : f32 to vector<2x1xf32>
    %27 = arith.addf %23, %26 : vector<2x1xf32>
    %28 = math.rsqrt %27 : vector<2x1xf32>
    %29 = vector.broadcast %28 : vector<2x1xf32> to vector<2x128xf32>
    %30 = arith.mulf %25, %29 : vector<2x128xf32>
    %31 = vector.broadcast %7 : vector<1x128xf32> to vector<2x128xf32>
    %32 = arith.mulf %30, %31 : vector<2x128xf32>
    %33 = vector.broadcast %8 : vector<1x128xf32> to vector<2x128xf32>
    %34 = arith.addf %32, %33 : vector<2x128xf32>
    %c0_14 = arith.constant 0 : index
    %c0_15 = arith.constant 0 : index
    %35 = vector.load %arg5[%c0_14, %c0_15] : memref<2x128xf32, #tpu.memory_space<vmem>>, vector<2x128xf32>
    tpu.vector_store %arg5[%c0_14, %c0_15], %34 {strides = array<i32>} : memref<2x128xf32, #tpu.memory_space<vmem>>, vector<2x128xf32>,
    return
  }
  func.func @transform_0(%arg0: i32, %arg1: i32) -> (i32, i32) {
    %c0_i32 = arith.constant 0 : i32
    return %arg0, %arg1 : i32, i32
  }
  func.func @transform_1(%arg0: i32, %arg1: i32) -> (i32, i32) {
    %c0_i32 = arith.constant 0 : i32
    %c0_i32_0 = arith.constant 0 : i32
    return %c0_i32, %arg1 : i32, i32
  }
  func.func @transform_2(%arg0: i32, %arg1: i32) -> (i32, i32) {
    %c0_i32 = arith.constant 0 : i32
    %c0_i32_0 = arith.constant 0 : i32
    %c0_i32_1 = arith.constant 0 : i32
    return %c0_i32, %c0_i32_0 : i32, i32
  }
  func.func @transform_3(%arg0: i32, %arg1: i32) -> (i32, i32) {
    %c0_i32 = arith.constant 0 : i32
    %c0_i32_0 = arith.constant 0 : i32
    return %arg0, %c0_i32 : i32, i32
  }
}

</mosaic_0001>

<llo_original>
// kernel: encoder_head.1
$region0: #{encoder_head.1}
  #allocation0 [shape = 'u32[]', space=smem, size = 0x4, offset = 0x4, fixed_abs, tag = 'smem constant byte address 0x4 - core index']
  #allocation1 [shape = 'u32[72,128]{1,0:T(1,128)}', space=vmem, size = 0x9000, scoped, tag = 'internal scratch']
  %s0 = inlined_call_operand.vmem [shape: f32[8,2048], index: 0, kind: input, shape index: {}]
  %s1 = inlined_call_operand.hbm [shape: bf16[128,2048], index: 1, kind: input, shape index: {}]
  %s2 = inlined_call_operand.vmem [shape: f32[3,128], index: 2, kind: input, shape index: {}]
  %s3 = inlined_call_operand.hbm [shape: f32[2,128], index: 3, kind: output, shape index: {}]
  %s4 = sld [smem:[#allocation0]]
  $region26: #{encoder_head.1} parent=0
    _
  %s6 = ssub.s32 1, %s4
  %s7 = scalar_select 0, %s6, %s4
  $region1: #{encoder_head.1} parent=0
    #allocation2 [shape = 'u8[524288]{0}', space=vmem, size = 0x80000, scoped, tag = 'input window, operand 1, single buffered']
    #allocation3 [shape = 's32[1]{0}', space=sflag, size = 0x4, scoped, tag = 'scoped memory for encoder_head.1']
    #allocation4 [shape = 's32[1]{0}', space=sflag, size = 0x4, scoped, tag = 'scoped memory for encoder_head.1']
    #allocation5 [shape = 'u8[1024]{0}', space=vmem, size = 0x400, scoped, tag = 'output window, operand 0, single buffered']
    %8 = vsyncpa [#allocation3], 0
    %9 = vsyncpa [#allocation4], 0
    // Predicated region
    $region2: #{encoder_head.1} parent=1 // pred_check
      _
    $region3: #{encoder_head.1} parent=1 // pred_check_branch
      %11 = sbr.rel (0) target = $region5
    $region4: #{encoder_head.1} parent=1 // pred_region
      _
    $region5: #{encoder_head.1} parent=1 // pred_fallthru
      _
    // Predicated region
    $region6: #{encoder_head.1} parent=1 // pred_check
      _
    $region7: #{encoder_head.1} parent=1 // pred_check_branch
      %13 = sbr.rel (0) target = $region9
    $region8: #{encoder_head.1} parent=1 // pred_region
      %15 = vsyncadd [#allocation3], 0
      %s16 = sshll.u32 %s1, 4
      %s17 = int_to_ptr.hbm [resolvable:$true] %s16
      %s18 = sshll.u32 [#allocation2], 4
      %s19 = int_to_ptr.vmem [resolvable:$true] %s18
      %24 = dma.hbm_to_vmem [thread:$0]  %s17, 16384, %s19, [#allocation3], 1024, 1024, 64
    $region9: #{encoder_head.1} parent=1 // pred_fallthru
      _
    // Predicated region
    $region10: #{encoder_head.1} parent=1 // pred_check
      _
    $region11: #{encoder_head.1} parent=1 // pred_check_branch
      %26 = sbr.rel (0) target = $region13
    $region12: #{encoder_head.1} parent=1 // pred_region
      _
    $region13: #{encoder_head.1} parent=1 // pred_fallthru
      _
    // Predicated region
    $region14: #{encoder_head.1} parent=1 // pred_check
      _
    $region15: #{encoder_head.1} parent=1 // pred_check_branch
      %28 = sbr.rel (0) target = $region17
    $region16: #{encoder_head.1} parent=1 // pred_region
      %30 = dma.done [#allocation3], 16384
    $region17: #{encoder_head.1} parent=1 // pred_fallthru
      _
    %v31 = vld [vmem:[%s0] sm:$0xff]
    %v32 = vld [vmem:[%s0 + $0x8] sm:$0xff]
    %v33 = vld [vmem:[%s0 + $0x10] sm:$0xff]
    %v34 = vld [vmem:[%s0 + $0x18] sm:$0xff]
    %v35 = vld [vmem:[%s0 + $0x20] sm:$0xff]
    %v36 = vld [vmem:[%s0 + $0x28] sm:$0xff]
    %v37 = vld [vmem:[%s0 + $0x30] sm:$0xff]
    %v38 = vld [vmem:[%s0 + $0x38] sm:$0xff]
    %v39 = vld [vmem:[%s0 + $0x40] sm:$0xff]
    %v40 = vld [vmem:[%s0 + $0x48] sm:$0xff]
    %v41 = vld [vmem:[%s0 + $0x50] sm:$0xff]
    %v42 = vld [vmem:[%s0 + $0x58] sm:$0xff]
    %v43 = vld [vmem:[%s0 + $0x60] sm:$0xff]
    %v44 = vld [vmem:[%s0 + $0x68] sm:$0xff]
    %v45 = vld [vmem:[%s0 + $0x70] sm:$0xff]
    %v46 = vld [vmem:[%s0 + $0x78] sm:$0xff]
    %v47 = vld [vmem:[#allocation2] sm:$0xff]
    %v48 = vld [vmem:[#allocation2 + $0x8] sm:$0xff]
    %v49 = vld [vmem:[#allocation2 + $0x10] sm:$0xff]
    %v50 = vld [vmem:[#allocation2 + $0x18] sm:$0xff]
    %v51 = vld [vmem:[#allocation2 + $0x20] sm:$0xff]
    %v52 = vld [vmem:[#allocation2 + $0x28] sm:$0xff]
    %v53 = vld [vmem:[#allocation2 + $0x30] sm:$0xff]
    %v54 = vld [vmem:[#allocation2 + $0x38] sm:$0xff]
    %v55 = vld [vmem:[#allocation2 + $0x40] sm:$0xff]
    %v56 = vld [vmem:[#allocation2 + $0x48] sm:$0xff]
    %v57 = vld [vmem:[#allocation2 + $0x50] sm:$0xff]
    %v58 = vld [vmem:[#allocation2 + $0x58] sm:$0xff]
    %v59 = vld [vmem:[#allocation2 + $0x60] sm:$0xff]
    %v60 = vld [vmem:[#allocation2 + $0x68] sm:$0xff]
    %v61 = vld [vmem:[#allocation2 + $0x70] sm:$0xff]
    %v62 = vld [vmem:[#allocation2 + $0x78] sm:$0xff]
    %v63 = vld [vmem:[#allocation2 + $0x80] sm:$0xff]
    %v64 = vld [vmem:[#allocation2 + $0x88] sm:$0xff]
    %v65 = vld [vmem:[#allocation2 + $0x90] sm:$0xff]
    %v66 = vld [vmem:[#allocation2 + $0x98] sm:$0xff]
    %v67 = vld [vmem:[#allocation2 + $0xa0] sm:$0xff]
    %v68 = vld [vmem:[#allocation2 + $0xa8] sm:$0xff]
    %v69 = vld [vmem:[#allocation2 + $0xb0] sm:$0xff]
    %v70 = vld [vmem:[#allocation2 + $0xb8] sm:$0xff]
    %v71 = vld [vmem:[#allocation2 + $0xc0] sm:$0xff]
    %v72 = vld [vmem:[#allocation2 + $0xc8] sm:$0xff]
    %v73 = vld [vmem:[#allocation2 + $0xd0] sm:$0xff]
    %v74 = vld [vmem:[#allocation2 + $0xd8] sm:$0xff]
    %v75 = vld [vmem:[#allocation2 + $0xe0] sm:$0xff]
    %v76 = vld [vmem:[#allocation2 + $0xe8] sm:$0xff]
    %v77 = vld [vmem:[#allocation2 + $0xf0] sm:$0xff]
    %v78 = vld [vmem:[#allocation2 + $0xf8] sm:$0xff]
    %v79 = vld [vmem:[#allocation2 + $0x100] sm:$0xff]
    %v80 = vld [vmem:[#allocation2 + $0x108] sm:$0xff]
    %v81 = vld [vmem:[#allocation2 + $0x110] sm:$0xff]
    %v82 = vld [vmem:[#allocation2 + $0x118] sm:$0xff]
    %v83 = vld [vmem:[#allocation2 + $0x120] sm:$0xff]
    %v84 = vld [vmem:[#allocation2 + $0x128] sm:$0xff]
    %v85 = vld [vmem:[#allocation2 + $0x130] sm:$0xff]
    %v86 = vld [vmem:[#allocation2 + $0x138] sm:$0xff]
    %v87 = vld [vmem:[#allocation2 + $0x140] sm:$0xff]
    %v88 = vld [vmem:[#allocation2 + $0x148] sm:$0xff]
    %v89 = vld [vmem:[#allocation2 + $0x150] sm:$0xff]
    %v90 = vld [vmem:[#allocation2 + $0x158] sm:$0xff]
    %v91 = vld [vmem:[#allocation2 + $0x160] sm:$0xff]
    %v92 = vld [vmem:[#allocation2 + $0x168] sm:$0xff]
    %v93 = vld [vmem:[#allocation2 + $0x170] sm:$0xff]
    %v94 = vld [vmem:[#allocation2 + $0x178] sm:$0xff]
    %v95 = vld [vmem:[#allocation2 + $0x180] sm:$0xff]
    %v96 = vld [vmem:[#allocation2 + $0x188] sm:$0xff]
    %v97 = vld [vmem:[#allocation2 + $0x190] sm:$0xff]
    %v98 = vld [vmem:[#allocation2 + $0x198] sm:$0xff]
    %v99 = vld [vmem:[#allocation2 + $0x1a0] sm:$0xff]
    %v100 = vld [vmem:[#allocation2 + $0x1a8] sm:$0xff]
    %v101 = vld [vmem:[#allocation2 + $0x1b0] sm:$0xff]
    %v102 = vld [vmem:[#allocation2 + $0x1b8] sm:$0xff]
    %v103 = vld [vmem:[#allocation2 + $0x1c0] sm:$0xff]
    %v104 = vld [vmem:[#allocation2 + $0x1c8] sm:$0xff]
    %v105 = vld [vmem:[#allocation2 + $0x1d0] sm:$0xff]
    %v106 = vld [vmem:[#allocation2 + $0x1d8] sm:$0xff]
    %v107 = vld [vmem:[#allocation2 + $0x1e0] sm:$0xff]
    %v108 = vld [vmem:[#allocation2 + $0x1e8] sm:$0xff]
    %v109 = vld [vmem:[#allocation2 + $0x1f0] sm:$0xff]
    %v110 = vld [vmem:[#allocation2 + $0x1f8] sm:$0xff]
    %v111 = vld [vmem:[#allocation2 + $0x200] sm:$0xff]
    %v112 = vld [vmem:[#allocation2 + $0x208] sm:$0xff]
    %v113 = vld [vmem:[#allocation2 + $0x210] sm:$0xff]
    %v114 = vld [vmem:[#allocation2 + $0x218] sm:$0xff]
    %v115 = vld [vmem:[#allocation2 + $0x220] sm:$0xff]
    %v116 = vld [vmem:[#allocation2 + $0x228] sm:$0xff]
    %v117 = vld [vmem:[#allocation2 + $0x230] sm:$0xff]
    %v118 = vld [vmem:[#allocation2 + $0x238] sm:$0xff]
    %v119 = vld [vmem:[#allocation2 + $0x240] sm:$0xff]
    %v120 = vld [vmem:[#allocation2 + $0x248] sm:$0xff]
    %v121 = vld [vmem:[#allocation2 + $0x250] sm:$0xff]
    %v122 = vld [vmem:[#allocation2 + $0x258] sm:$0xff]
    %v123 = vld [vmem:[#allocation2 + $0x260] sm:$0xff]
    %v124 = vld [vmem:[#allocation2 + $0x268] sm:$0xff]
    %v125 = vld [vmem:[#allocation2 + $0x270] sm:$0xff]
    %v126 = vld [vmem:[#allocation2 + $0x278] sm:$0xff]
    %v127 = vld [vmem:[#allocation2 + $0x280] sm:$0xff]
    %v128 = vld [vmem:[#allocation2 + $0x288] sm:$0xff]
    %v129 = vld [vmem:[#allocation2 + $0x290] sm:$0xff]
    %v130 = vld [vmem:[#allocation2 + $0x298] sm:$0xff]
    %v131 = vld [vmem:[#allocation2 + $0x2a0] sm:$0xff]
    %v132 = vld [vmem:[#allocation2 + $0x2a8] sm:$0xff]
    %v133 = vld [vmem:[#allocation2 + $0x2b0] sm:$0xff]
    %v134 = vld [vmem:[#allocation2 + $0x2b8] sm:$0xff]
    %v135 = vld [vmem:[#allocation2 + $0x2c0] sm:$0xff]
    %v136 = vld [vmem:[#allocation2 + $0x2c8] sm:$0xff]
    %v137 = vld [vmem:[#allocation2 + $0x2d0] sm:$0xff]
    %v138 = vld [vmem:[#allocation2 + $0x2d8] sm:$0xff]
    %v139 = vld [vmem:[#allocation2 + $0x2e0] sm:$0xff]
    %v140 = vld [vmem:[#allocation2 + $0x2e8] sm:$0xff]
    %v141 = vld [vmem:[#allocation2 + $0x2f0] sm:$0xff]
    %v142 = vld [vmem:[#allocation2 + $0x2f8] sm:$0xff]
    %v143 = vld [vmem:[#allocation2 + $0x300] sm:$0xff]
    %v144 = vld [vmem:[#allocation2 + $0x308] sm:$0xff]
    %v145 = vld [vmem:[#allocation2 + $0x310] sm:$0xff]
    %v146 = vld [vmem:[#allocation2 + $0x318] sm:$0xff]
    %v147 = vld [vmem:[#allocation2 + $0x320] sm:$0xff]
    %v148 = vld [vmem:[#allocation2 + $0x328] sm:$0xff]
    %v149 = vld [vmem:[#allocation2 + $0x330] sm:$0xff]
    %v150 = vld [vmem:[#allocation2 + $0x338] sm:$0xff]
    %v151 = vld [vmem:[#allocation2 + $0x340] sm:$0xff]
    %v152 = vld [vmem:[#allocation2 + $0x348] sm:$0xff]
    %v153 = vld [vmem:[#allocation2 + $0x350] sm:$0xff]
    %v154 = vld [vmem:[#allocation2 + $0x358] sm:$0xff]
    %v155 = vld [vmem:[#allocation2 + $0x360] sm:$0xff]
    %v156 = vld [vmem:[#allocation2 + $0x368] sm:$0xff]
    %v157 = vld [vmem:[#allocation2 + $0x370] sm:$0xff]
    %v158 = vld [vmem:[#allocation2 + $0x378] sm:$0xff]
    %v159 = vld [vmem:[#allocation2 + $0x380] sm:$0xff]
    %v160 = vld [vmem:[#allocation2 + $0x388] sm:$0xff]
    %v161 = vld [vmem:[#allocation2 + $0x390] sm:$0xff]
    %v162 = vld [vmem:[#allocation2 + $0x398] sm:$0xff]
    %v163 = vld [vmem:[#allocation2 + $0x3a0] sm:$0xff]
    %v164 = vld [vmem:[#allocation2 + $0x3a8] sm:$0xff]
    %v165 = vld [vmem:[#allocation2 + $0x3b0] sm:$0xff]
    %v166 = vld [vmem:[#allocation2 + $0x3b8] sm:$0xff]
    %v167 = vld [vmem:[#allocation2 + $0x3c0] sm:$0xff]
    %v168 = vld [vmem:[#allocation2 + $0x3c8] sm:$0xff]
    %v169 = vld [vmem:[#allocation2 + $0x3d0] sm:$0xff]
    %v170 = vld [vmem:[#allocation2 + $0x3d8] sm:$0xff]
    %v171 = vld [vmem:[#allocation2 + $0x3e0] sm:$0xff]
    %v172 = vld [vmem:[#allocation2 + $0x3e8] sm:$0xff]
    %v173 = vld [vmem:[#allocation2 + $0x3f0] sm:$0xff]
    %v174 = vld [vmem:[#allocation2 + $0x3f8] sm:$0xff]
    %v175 = vunpack.c.l.bf16 %v47
    %v176 = vunpack.c.h.bf16 %v47
    %v177 = vunpack.c.l.bf16 %v48
    %v178 = vunpack.c.h.bf16 %v48
    %v179 = vunpack.c.l.bf16 %v49
    %v180 = vunpack.c.h.bf16 %v49
    %v181 = vunpack.c.l.bf16 %v50
    %v182 = vunpack.c.h.bf16 %v50
    %v183 = vunpack.c.l.bf16 %v51
    %v184 = vunpack.c.h.bf16 %v51
    %v185 = vunpack.c.l.bf16 %v52
    %v186 = vunpack.c.h.bf16 %v52
    %v187 = vunpack.c.l.bf16 %v53
    %v188 = vunpack.c.h.bf16 %v53
    %v189 = vunpack.c.l.bf16 %v54
    %v190 = vunpack.c.h.bf16 %v54
    %v191 = vunpack.c.l.bf16 %v55
    %v192 = vunpack.c.h.bf16 %v55
    %v193 = vunpack.c.l.bf16 %v56
    %v194 = vunpack.c.h.bf16 %v56
    %v195 = vunpack.c.l.bf16 %v57
    %v196 = vunpack.c.h.bf16 %v57
    %v197 = vunpack.c.l.bf16 %v58
    %v198 = vunpack.c.h.bf16 %v58
    %v199 = vunpack.c.l.bf16 %v59
    %v200 = vunpack.c.h.bf16 %v59
    %v201 = vunpack.c.l.bf16 %v60
    %v202 = vunpack.c.h.bf16 %v60
    %v203 = vunpack.c.l.bf16 %v61
    %v204 = vunpack.c.h.bf16 %v61
    %v205 = vunpack.c.l.bf16 %v62
    %v206 = vunpack.c.h.bf16 %v62
    %v207 = vunpack.c.l.bf16 %v63
    %v208 = vunpack.c.h.bf16 %v63
    %v209 = vunpack.c.l.bf16 %v64
    %v210 = vunpack.c.h.bf16 %v64
    %v211 = vunpack.c.l.bf16 %v65
    %v212 = vunpack.c.h.bf16 %v65
    %v213 = vunpack.c.l.bf16 %v66
    %v214 = vunpack.c.h.bf16 %v66
    %v215 = vunpack.c.l.bf16 %v67
    %v216 = vunpack.c.h.bf16 %v67
    %v217 = vunpack.c.l.bf16 %v68
    %v218 = vunpack.c.h.bf16 %v68
    %v219 = vunpack.c.l.bf16 %v69
    %v220 = vunpack.c.h.bf16 %v69
    %v221 = vunpack.c.l.bf16 %v70
    %v222 = vunpack.c.h.bf16 %v70
    %v223 = vunpack.c.l.bf16 %v71
    %v224 = vunpack.c.h.bf16 %v71
    %v225 = vunpack.c.l.bf16 %v72
    %v226 = vunpack.c.h.bf16 %v72
    %v227 = vunpack.c.l.bf16 %v73
    %v228 = vunpack.c.h.bf16 %v73
    %v229 = vunpack.c.l.bf16 %v74
    %v230 = vunpack.c.h.bf16 %v74
    %v231 = vunpack.c.l.bf16 %v75
    %v232 = vunpack.c.h.bf16 %v75
    %v233 = vunpack.c.l.bf16 %v76
    %v234 = vunpack.c.h.bf16 %v76
    %v235 = vunpack.c.l.bf16 %v77
    %v236 = vunpack.c.h.bf16 %v77
    %v237 = vunpack.c.l.bf16 %v78
    %v238 = vunpack.c.h.bf16 %v78
    %v239 = vunpack.c.l.bf16 %v79
    %v240 = vunpack.c.h.bf16 %v79
    %v241 = vunpack.c.l.bf16 %v80
    %v242 = vunpack.c.h.bf16 %v80
    %v243 = vunpack.c.l.bf16 %v81
    %v244 = vunpack.c.h.bf16 %v81
    %v245 = vunpack.c.l.bf16 %v82
    %v246 = vunpack.c.h.bf16 %v82
    %v247 = vunpack.c.l.bf16 %v83
    %v248 = vunpack.c.h.bf16 %v83
    %v249 = vunpack.c.l.bf16 %v84
    %v250 = vunpack.c.h.bf16 %v84
    %v251 = vunpack.c.l.bf16 %v85
    %v252 = vunpack.c.h.bf16 %v85
    %v253 = vunpack.c.l.bf16 %v86
    %v254 = vunpack.c.h.bf16 %v86
    %v255 = vunpack.c.l.bf16 %v87
    %v256 = vunpack.c.h.bf16 %v87
    %v257 = vunpack.c.l.bf16 %v88
    %v258 = vunpack.c.h.bf16 %v88
    %v259 = vunpack.c.l.bf16 %v89
    %v260 = vunpack.c.h.bf16 %v89
    %v261 = vunpack.c.l.bf16 %v90
    %v262 = vunpack.c.h.bf16 %v90
    %v263 = vunpack.c.l.bf16 %v91
    %v264 = vunpack.c.h.bf16 %v91
    %v265 = vunpack.c.l.bf16 %v92
    %v266 = vunpack.c.h.bf16 %v92
    %v267 = vunpack.c.l.bf16 %v93
    %v268 = vunpack.c.h.bf16 %v93
    %v269 = vunpack.c.l.bf16 %v94
    %v270 = vunpack.c.h.bf16 %v94
    %v271 = vunpack.c.l.bf16 %v95
    %v272 = vunpack.c.h.bf16 %v95
    %v273 = vunpack.c.l.bf16 %v96
    %v274 = vunpack.c.h.bf16 %v96
    %v275 = vunpack.c.l.bf16 %v97
    %v276 = vunpack.c.h.bf16 %v97
    %v277 = vunpack.c.l.bf16 %v98
    %v278 = vunpack.c.h.bf16 %v98
    %v279 = vunpack.c.l.bf16 %v99
    %v280 = vunpack.c.h.bf16 %v99
    %v281 = vunpack.c.l.bf16 %v100
    %v282 = vunpack.c.h.bf16 %v100
    %v283 = vunpack.c.l.bf16 %v101
    %v284 = vunpack.c.h.bf16 %v101
    %v285 = vunpack.c.l.bf16 %v102
    %v286 = vunpack.c.h.bf16 %v102
    %v287 = vunpack.c.l.bf16 %v103
    %v288 = vunpack.c.h.bf16 %v103
    %v289 = vunpack.c.l.bf16 %v104
    %v290 = vunpack.c.h.bf16 %v104
    %v291 = vunpack.c.l.bf16 %v105
    %v292 = vunpack.c.h.bf16 %v105
    %v293 = vunpack.c.l.bf16 %v106
    %v294 = vunpack.c.h.bf16 %v106
    %v295 = vunpack.c.l.bf16 %v107
    %v296 = vunpack.c.h.bf16 %v107
    %v297 = vunpack.c.l.bf16 %v108
    %v298 = vunpack.c.h.bf16 %v108
    %v299 = vunpack.c.l.bf16 %v109
    %v300 = vunpack.c.h.bf16 %v109
    %v301 = vunpack.c.l.bf16 %v110
    %v302 = vunpack.c.h.bf16 %v110
    %v303 = vunpack.c.l.bf16 %v111
    %v304 = vunpack.c.h.bf16 %v111
    %v305 = vunpack.c.l.bf16 %v112
    %v306 = vunpack.c.h.bf16 %v112
    %v307 = vunpack.c.l.bf16 %v113
    %v308 = vunpack.c.h.bf16 %v113
    %v309 = vunpack.c.l.bf16 %v114
    %v310 = vunpack.c.h.bf16 %v114
    %v311 = vunpack.c.l.bf16 %v115
    %v312 = vunpack.c.h.bf16 %v115
    %v313 = vunpack.c.l.bf16 %v116
    %v314 = vunpack.c.h.bf16 %v116
    %v315 = vunpack.c.l.bf16 %v117
    %v316 = vunpack.c.h.bf16 %v117
    %v317 = vunpack.c.l.bf16 %v118
    %v318 = vunpack.c.h.bf16 %v118
    %v319 = vunpack.c.l.bf16 %v119
    %v320 = vunpack.c.h.bf16 %v119
    %v321 = vunpack.c.l.bf16 %v120
    %v322 = vunpack.c.h.bf16 %v120
    %v323 = vunpack.c.l.bf16 %v121
    %v324 = vunpack.c.h.bf16 %v121
    %v325 = vunpack.c.l.bf16 %v122
    %v326 = vunpack.c.h.bf16 %v122
    %v327 = vunpack.c.l.bf16 %v123
    %v328 = vunpack.c.h.bf16 %v123
    %v329 = vunpack.c.l.bf16 %v124
    %v330 = vunpack.c.h.bf16 %v124
    %v331 = vunpack.c.l.bf16 %v125
    %v332 = vunpack.c.h.bf16 %v125
    %v333 = vunpack.c.l.bf16 %v126
    %v334 = vunpack.c.h.bf16 %v126
    %v335 = vunpack.c.l.bf16 %v127
    %v336 = vunpack.c.h.bf16 %v127
    %v337 = vunpack.c.l.bf16 %v128
    %v338 = vunpack.c.h.bf16 %v128
    %v339 = vunpack.c.l.bf16 %v129
    %v340 = vunpack.c.h.bf16 %v129
    %v341 = vunpack.c.l.bf16 %v130
    %v342 = vunpack.c.h.bf16 %v130
    %v343 = vunpack.c.l.bf16 %v131
    %v344 = vunpack.c.h.bf16 %v131
    %v345 = vunpack.c.l.bf16 %v132
    %v346 = vunpack.c.h.bf16 %v132
    %v347 = vunpack.c.l.bf16 %v133
    %v348 = vunpack.c.h.bf16 %v133
    %v349 = vunpack.c.l.bf16 %v134
    %v350 = vunpack.c.h.bf16 %v134
    %v351 = vunpack.c.l.bf16 %v135
    %v352 = vunpack.c.h.bf16 %v135
    %v353 = vunpack.c.l.bf16 %v136
    %v354 = vunpack.c.h.bf16 %v136
    %v355 = vunpack.c.l.bf16 %v137
    %v356 = vunpack.c.h.bf16 %v137
    %v357 = vunpack.c.l.bf16 %v138
    %v358 = vunpack.c.h.bf16 %v138
    %v359 = vunpack.c.l.bf16 %v139
    %v360 = vunpack.c.h.bf16 %v139
    %v361 = vunpack.c.l.bf16 %v140
    %v362 = vunpack.c.h.bf16 %v140
    %v363 = vunpack.c.l.bf16 %v141
    %v364 = vunpack.c.h.bf16 %v141
    %v365 = vunpack.c.l.bf16 %v142
    %v366 = vunpack.c.h.bf16 %v142
    %v367 = vunpack.c.l.bf16 %v143
    %v368 = vunpack.c.h.bf16 %v143
    %v369 = vunpack.c.l.bf16 %v144
    %v370 = vunpack.c.h.bf16 %v144
    %v371 = vunpack.c.l.bf16 %v145
    %v372 = vunpack.c.h.bf16 %v145
    %v373 = vunpack.c.l.bf16 %v146
    %v374 = vunpack.c.h.bf16 %v146
    %v375 = vunpack.c.l.bf16 %v147
    %v376 = vunpack.c.h.bf16 %v147
    %v377 = vunpack.c.l.bf16 %v148
    %v378 = vunpack.c.h.bf16 %v148
    %v379 = vunpack.c.l.bf16 %v149
    %v380 = vunpack.c.h.bf16 %v149
    %v381 = vunpack.c.l.bf16 %v150
    %v382 = vunpack.c.h.bf16 %v150
    %v383 = vunpack.c.l.bf16 %v151
    %v384 = vunpack.c.h.bf16 %v151
    %v385 = vunpack.c.l.bf16 %v152
    %v386 = vunpack.c.h.bf16 %v152
    %v387 = vunpack.c.l.bf16 %v153
    %v388 = vunpack.c.h.bf16 %v153
    %v389 = vunpack.c.l.bf16 %v154
    %v390 = vunpack.c.h.bf16 %v154
    %v391 = vunpack.c.l.bf16 %v155
    %v392 = vunpack.c.h.bf16 %v155
    %v393 = vunpack.c.l.bf16 %v156
    %v394 = vunpack.c.h.bf16 %v156
    %v395 = vunpack.c.l.bf16 %v157
    %v396 = vunpack.c.h.bf16 %v157
    %v397 = vunpack.c.l.bf16 %v158
    %v398 = vunpack.c.h.bf16 %v158
    %v399 = vunpack.c.l.bf16 %v159
    %v400 = vunpack.c.h.bf16 %v159
    %v401 = vunpack.c.l.bf16 %v160
    %v402 = vunpack.c.h.bf16 %v160
    %v403 = vunpack.c.l.bf16 %v161
    %v404 = vunpack.c.h.bf16 %v161
    %v405 = vunpack.c.l.bf16 %v162
    %v406 = vunpack.c.h.bf16 %v162
    %v407 = vunpack.c.l.bf16 %v163
    %v408 = vunpack.c.h.bf16 %v163
    %v409 = vunpack.c.l.bf16 %v164
    %v410 = vunpack.c.h.bf16 %v164
    %v411 = vunpack.c.l.bf16 %v165
    %v412 = vunpack.c.h.bf16 %v165
    %v413 = vunpack.c.l.bf16 %v166
    %v414 = vunpack.c.h.bf16 %v166
    %v415 = vunpack.c.l.bf16 %v167
    %v416 = vunpack.c.h.bf16 %v167
    %v417 = vunpack.c.l.bf16 %v168
    %v418 = vunpack.c.h.bf16 %v168
    %v419 = vunpack.c.l.bf16 %v169
    %v420 = vunpack.c.h.bf16 %v169
    %v421 = vunpack.c.l.bf16 %v170
    %v422 = vunpack.c.h.bf16 %v170
    %v423 = vunpack.c.l.bf16 %v171
    %v424 = vunpack.c.h.bf16 %v171
    %v425 = vunpack.c.l.bf16 %v172
    %v426 = vunpack.c.h.bf16 %v172
    %v427 = vunpack.c.l.bf16 %v173
    %v428 = vunpack.c.h.bf16 %v173
    %v429 = vunpack.c.l.bf16 %v174
    %v430 = vunpack.c.h.bf16 %v174
    %431 = vmatpush.xpose.msra.mxu0 %v415
    %432 = vmatpush.xpose.msra.mxu0 %v399
    %433 = vmatpush.xpose.msra.mxu0 %v383
    %434 = vmatpush.xpose.msra.mxu0 %v367
    %435 = vmatpush.xpose.msra.mxu0 %v351
    %436 = vmatpush.xpose.msra.mxu0 %v335
    %437 = vmatpush.xpose.msra.mxu0 %v319
    %438 = vmatpush.xpose.msra.mxu0 %v303
    %439 = vmatpush.xpose.msra.mxu0 %v287
    %440 = vmatpush.xpose.msra.mxu0 %v271
    %441 = vmatpush.xpose.msra.mxu0 %v255
    %442 = vmatpush.xpose.msra.mxu0 %v239
    %443 = vmatpush.xpose.msra.mxu0 %v223
    %444 = vmatpush.xpose.msra.mxu0 %v207
    %445 = vmatpush.xpose.msra.mxu0 %v191
    %446 = vmatpush.xpose.msra.mxu0 %v175
    %447 = vmatmul.f32.gmra.mxu0 %v31
    %v448 = vpop.f32.mrf.mxu0
    %v449 = vadd.f32 0.0, %v448
    %450 = vdwg.mxu0
    %451 = vmatpush.xpose.msra.mxu0 %v416
    %452 = vmatpush.xpose.msra.mxu0 %v400
    %453 = vmatpush.xpose.msra.mxu0 %v384
    %454 = vmatpush.xpose.msra.mxu0 %v368
    %455 = vmatpush.xpose.msra.mxu0 %v352
    %456 = vmatpush.xpose.msra.mxu0 %v336
    %457 = vmatpush.xpose.msra.mxu0 %v320
    %458 = vmatpush.xpose.msra.mxu0 %v304
    %459 = vmatpush.xpose.msra.mxu0 %v288
    %460 = vmatpush.xpose.msra.mxu0 %v272
    %461 = vmatpush.xpose.msra.mxu0 %v256
    %462 = vmatpush.xpose.msra.mxu0 %v240
    %463 = vmatpush.xpose.msra.mxu0 %v224
    %464 = vmatpush.xpose.msra.mxu0 %v208
    %465 = vmatpush.xpose.msra.mxu0 %v192
    %466 = vmatpush.xpose.msra.mxu0 %v176
    %467 = vmatmul.f32.gmra.mxu0 %v32
    %v468 = vpop.f32.mrf.mxu0
    %v469 = vadd.f32 %v449, %v468
    %470 = vdwg.mxu0
    %471 = vmatpush.xpose.msra.mxu0 %v417
    %472 = vmatpush.xpose.msra.mxu0 %v401
    %473 = vmatpush.xpose.msra.mxu0 %v385
    %474 = vmatpush.xpose.msra.mxu0 %v369
    %475 = vmatpush.xpose.msra.mxu0 %v353
    %476 = vmatpush.xpose.msra.mxu0 %v337
    %477 = vmatpush.xpose.msra.mxu0 %v321
    %478 = vmatpush.xpose.msra.mxu0 %v305
    %479 = vmatpush.xpose.msra.mxu0 %v289
    %480 = vmatpush.xpose.msra.mxu0 %v273
    %481 = vmatpush.xpose.msra.mxu0 %v257
    %482 = vmatpush.xpose.msra.mxu0 %v241
    %483 = vmatpush.xpose.msra.mxu0 %v225
    %484 = vmatpush.xpose.msra.mxu0 %v209
    %485 = vmatpush.xpose.msra.mxu0 %v193
    %486 = vmatpush.xpose.msra.mxu0 %v177
    %487 = vmatmul.f32.gmra.mxu0 %v33
    %v488 = vpop.f32.mrf.mxu0
    %v489 = vadd.f32 %v469, %v488
    %490 = vdwg.mxu0
    %491 = vmatpush.xpose.msra.mxu0 %v418
    %492 = vmatpush.xpose.msra.mxu0 %v402
    %493 = vmatpush.xpose.msra.mxu0 %v386
    %494 = vmatpush.xpose.msra.mxu0 %v370
    %495 = vmatpush.xpose.msra.mxu0 %v354
    %496 = vmatpush.xpose.msra.mxu0 %v338
    %497 = vmatpush.xpose.msra.mxu0 %v322
    %498 = vmatpush.xpose.msra.mxu0 %v306
    %499 = vmatpush.xpose.msra.mxu0 %v290
    %500 = vmatpush.xpose.msra.mxu0 %v274
    %501 = vmatpush.xpose.msra.mxu0 %v258
    %502 = vmatpush.xpose.msra.mxu0 %v242
    %503 = vmatpush.xpose.msra.mxu0 %v226
    %504 = vmatpush.xpose.msra.mxu0 %v210
    %505 = vmatpush.xpose.msra.mxu0 %v194
    %506 = vmatpush.xpose.msra.mxu0 %v178
    %507 = vmatmul.f32.gmra.mxu0 %v34
    %v508 = vpop.f32.mrf.mxu0
    %v509 = vadd.f32 %v489, %v508
    %510 = vdwg.mxu0
    %511 = vmatpush.xpose.msra.mxu0 %v419
    %512 = vmatpush.xpose.msra.mxu0 %v403
    %513 = vmatpush.xpose.msra.mxu0 %v387
    %514 = vmatpush.xpose.msra.mxu0 %v371
    %515 = vmatpush.xpose.msra.mxu0 %v355
    %516 = vmatpush.xpose.msra.mxu0 %v339
    %517 = vmatpush.xpose.msra.mxu0 %v323
    %518 = vmatpush.xpose.msra.mxu0 %v307
    %519 = vmatpush.xpose.msra.mxu0 %v291
    %520 = vmatpush.xpose.msra.mxu0 %v275
    %521 = vmatpush.xpose.msra.mxu0 %v259
    %522 = vmatpush.xpose.msra.mxu0 %v243
    %523 = vmatpush.xpose.msra.mxu0 %v227
    %524 = vmatpush.xpose.msra.mxu0 %v211
    %525 = vmatpush.xpose.msra.mxu0 %v195
    %526 = vmatpush.xpose.msra.mxu0 %v179
    %527 = vmatmul.f32.gmra.mxu0 %v35
    %v528 = vpop.f32.mrf.mxu0
    %v529 = vadd.f32 %v509, %v528
    %530 = vdwg.mxu0
    %531 = vmatpush.xpose.msra.mxu0 %v420
    %532 = vmatpush.xpose.msra.mxu0 %v404
    %533 = vmatpush.xpose.msra.mxu0 %v388
    %534 = vmatpush.xpose.msra.mxu0 %v372
    %535 = vmatpush.xpose.msra.mxu0 %v356
    %536 = vmatpush.xpose.msra.mxu0 %v340
    %537 = vmatpush.xpose.msra.mxu0 %v324
    %538 = vmatpush.xpose.msra.mxu0 %v308
    %539 = vmatpush.xpose.msra.mxu0 %v292
    %540 = vmatpush.xpose.msra.mxu0 %v276
    %541 = vmatpush.xpose.msra.mxu0 %v260
    %542 = vmatpush.xpose.msra.mxu0 %v244
    %543 = vmatpush.xpose.msra.mxu0 %v228
    %544 = vmatpush.xpose.msra.mxu0 %v212
    %545 = vmatpush.xpose.msra.mxu0 %v196
    %546 = vmatpush.xpose.msra.mxu0 %v180
    %547 = vmatmul.f32.gmra.mxu0 %v36
    %v548 = vpop.f32.mrf.mxu0
    %v549 = vadd.f32 %v529, %v548
    %550 = vdwg.mxu0
    %551 = vmatpush.xpose.msra.mxu0 %v421
    %552 = vmatpush.xpose.msra.mxu0 %v405
    %553 = vmatpush.xpose.msra.mxu0 %v389
    %554 = vmatpush.xpose.msra.mxu0 %v373
    %555 = vmatpush.xpose.msra.mxu0 %v357
    %556 = vmatpush.xpose.msra.mxu0 %v341
    %557 = vmatpush.xpose.msra.mxu0 %v325
    %558 = vmatpush.xpose.msra.mxu0 %v309
    %559 = vmatpush.xpose.msra.mxu0 %v293
    %560 = vmatpush.xpose.msra.mxu0 %v277
    %561 = vmatpush.xpose.msra.mxu0 %v261
    %562 = vmatpush.xpose.msra.mxu0 %v245
    %563 = vmatpush.xpose.msra.mxu0 %v229
    %564 = vmatpush.xpose.msra.mxu0 %v213
    %565 = vmatpush.xpose.msra.mxu0 %v197
    %566 = vmatpush.xpose.msra.mxu0 %v181
    %567 = vmatmul.f32.gmra.mxu0 %v37
    %v568 = vpop.f32.mrf.mxu0
    %v569 = vadd.f32 %v549, %v568
    %570 = vdwg.mxu0
    %571 = vmatpush.xpose.msra.mxu0 %v422
    %572 = vmatpush.xpose.msra.mxu0 %v406
    %573 = vmatpush.xpose.msra.mxu0 %v390
    %574 = vmatpush.xpose.msra.mxu0 %v374
    %575 = vmatpush.xpose.msra.mxu0 %v358
    %576 = vmatpush.xpose.msra.mxu0 %v342
    %577 = vmatpush.xpose.msra.mxu0 %v326
    %578 = vmatpush.xpose.msra.mxu0 %v310
    %579 = vmatpush.xpose.msra.mxu0 %v294
    %580 = vmatpush.xpose.msra.mxu0 %v278
    %581 = vmatpush.xpose.msra.mxu0 %v262
    %582 = vmatpush.xpose.msra.mxu0 %v246
    %583 = vmatpush.xpose.msra.mxu0 %v230
    %584 = vmatpush.xpose.msra.mxu0 %v214
    %585 = vmatpush.xpose.msra.mxu0 %v198
    %586 = vmatpush.xpose.msra.mxu0 %v182
    %587 = vmatmul.f32.gmra.mxu0 %v38
    %v588 = vpop.f32.mrf.mxu0
    %v589 = vadd.f32 %v569, %v588
    %590 = vdwg.mxu0
    %591 = vmatpush.xpose.msra.mxu0 %v423
    %592 = vmatpush.xpose.msra.mxu0 %v407
    %593 = vmatpush.xpose.msra.mxu0 %v391
    %594 = vmatpush.xpose.msra.mxu0 %v375
    %595 = vmatpush.xpose.msra.mxu0 %v359
    %596 = vmatpush.xpose.msra.mxu0 %v343
    %597 = vmatpush.xpose.msra.mxu0 %v327
    %598 = vmatpush.xpose.msra.mxu0 %v311
    %599 = vmatpush.xpose.msra.mxu0 %v295
    %600 = vmatpush.xpose.msra.mxu0 %v279
    %601 = vmatpush.xpose.msra.mxu0 %v263
    %602 = vmatpush.xpose.msra.mxu0 %v247
    %603 = vmatpush.xpose.msra.mxu0 %v231
    %604 = vmatpush.xpose.msra.mxu0 %v215
    %605 = vmatpush.xpose.msra.mxu0 %v199
    %606 = vmatpush.xpose.msra.mxu0 %v183
    %607 = vmatmul.f32.gmra.mxu0 %v39
    %v608 = vpop.f32.mrf.mxu0
    %v609 = vadd.f32 %v589, %v608
    %610 = vdwg.mxu0
    %611 = vmatpush.xpose.msra.mxu0 %v424
    %612 = vmatpush.xpose.msra.mxu0 %v408
    %613 = vmatpush.xpose.msra.mxu0 %v392
    %614 = vmatpush.xpose.msra.mxu0 %v376
    %615 = vmatpush.xpose.msra.mxu0 %v360
    %616 = vmatpush.xpose.msra.mxu0 %v344
    %617 = vmatpush.xpose.msra.mxu0 %v328
    %618 = vmatpush.xpose.msra.mxu0 %v312
    %619 = vmatpush.xpose.msra.mxu0 %v296
    %620 = vmatpush.xpose.msra.mxu0 %v280
    %621 = vmatpush.xpose.msra.mxu0 %v264
    %622 = vmatpush.xpose.msra.mxu0 %v248
    %623 = vmatpush.xpose.msra.mxu0 %v232
    %624 = vmatpush.xpose.msra.mxu0 %v216
    %625 = vmatpush.xpose.msra.mxu0 %v200
    %626 = vmatpush.xpose.msra.mxu0 %v184
    %627 = vmatmul.f32.gmra.mxu0 %v40
    %v628 = vpop.f32.mrf.mxu0
    %v629 = vadd.f32 %v609, %v628
    %630 = vdwg.mxu0
    %631 = vmatpush.xpose.msra.mxu0 %v425
    %632 = vmatpush.xpose.msra.mxu0 %v409
    %633 = vmatpush.xpose.msra.mxu0 %v393
    %634 = vmatpush.xpose.msra.mxu0 %v377
    %635 = vmatpush.xpose.msra.mxu0 %v361
    %636 = vmatpush.xpose.msra.mxu0 %v345
    %637 = vmatpush.xpose.msra.mxu0 %v329
    %638 = vmatpush.xpose.msra.mxu0 %v313
    %639 = vmatpush.xpose.msra.mxu0 %v297
    %640 = vmatpush.xpose.msra.mxu0 %v281
    %641 = vmatpush.xpose.msra.mxu0 %v265
    %642 = vmatpush.xpose.msra.mxu0 %v249
    %643 = vmatpush.xpose.msra.mxu0 %v233
    %644 = vmatpush.xpose.msra.mxu0 %v217
    %645 = vmatpush.xpose.msra.mxu0 %v201
    %646 = vmatpush.xpose.msra.mxu0 %v185
    %647 = vmatmul.f32.gmra.mxu0 %v41
    %v648 = vpop.f32.mrf.mxu0
    %v649 = vadd.f32 %v629, %v648
    %650 = vdwg.mxu0
    %651 = vmatpush.xpose.msra.mxu0 %v426
    %652 = vmatpush.xpose.msra.mxu0 %v410
    %653 = vmatpush.xpose.msra.mxu0 %v394
    %654 = vmatpush.xpose.msra.mxu0 %v378
    %655 = vmatpush.xpose.msra.mxu0 %v362
    %656 = vmatpush.xpose.msra.mxu0 %v346
    %657 = vmatpush.xpose.msra.mxu0 %v330
    %658 = vmatpush.xpose.msra.mxu0 %v314
    %659 = vmatpush.xpose.msra.mxu0 %v298
    %660 = vmatpush.xpose.msra.mxu0 %v282
    %661 = vmatpush.xpose.msra.mxu0 %v266
    %662 = vmatpush.xpose.msra.mxu0 %v250
    %663 = vmatpush.xpose.msra.mxu0 %v234
    %664 = vmatpush.xpose.msra.mxu0 %v218
    %665 = vmatpush.xpose.msra.mxu0 %v202
    %666 = vmatpush.xpose.msra.mxu0 %v186
    %667 = vmatmul.f32.gmra.mxu0 %v42
    %v668 = vpop.f32.mrf.mxu0
    %v669 = vadd.f32 %v649, %v668
    %670 = vdwg.mxu0
    %671 = vmatpush.xpose.msra.mxu0 %v427
    %672 = vmatpush.xpose.msra.mxu0 %v411
    %673 = vmatpush.xpose.msra.mxu0 %v395
    %674 = vmatpush.xpose.msra.mxu0 %v379
    %675 = vmatpush.xpose.msra.mxu0 %v363
    %676 = vmatpush.xpose.msra.mxu0 %v347
    %677 = vmatpush.xpose.msra.mxu0 %v331
    %678 = vmatpush.xpose.msra.mxu0 %v315
    %679 = vmatpush.xpose.msra.mxu0 %v299
    %680 = vmatpush.xpose.msra.mxu0 %v283
    %681 = vmatpush.xpose.msra.mxu0 %v267
    %682 = vmatpush.xpose.msra.mxu0 %v251
    %683 = vmatpush.xpose.msra.mxu0 %v235
    %684 = vmatpush.xpose.msra.mxu0 %v219
    %685 = vmatpush.xpose.msra.mxu0 %v203
    %686 = vmatpush.xpose.msra.mxu0 %v187
    %687 = vmatmul.f32.gmra.mxu0 %v43
    %v688 = vpop.f32.mrf.mxu0
    %v689 = vadd.f32 %v669, %v688
    %690 = vdwg.mxu0
    %691 = vmatpush.xpose.msra.mxu0 %v428
    %692 = vmatpush.xpose.msra.mxu0 %v412
    %693 = vmatpush.xpose.msra.mxu0 %v396
    %694 = vmatpush.xpose.msra.mxu0 %v380
    %695 = vmatpush.xpose.msra.mxu0 %v364
    %696 = vmatpush.xpose.msra.mxu0 %v348
    %697 = vmatpush.xpose.msra.mxu0 %v332
    %698 = vmatpush.xpose.msra.mxu0 %v316
    %699 = vmatpush.xpose.msra.mxu0 %v300
    %700 = vmatpush.xpose.msra.mxu0 %v284
    %701 = vmatpush.xpose.msra.mxu0 %v268
    %702 = vmatpush.xpose.msra.mxu0 %v252
    %703 = vmatpush.xpose.msra.mxu0 %v236
    %704 = vmatpush.xpose.msra.mxu0 %v220
    %705 = vmatpush.xpose.msra.mxu0 %v204
    %706 = vmatpush.xpose.msra.mxu0 %v188
    %707 = vmatmul.f32.gmra.mxu0 %v44
    %v708 = vpop.f32.mrf.mxu0
    %v709 = vadd.f32 %v689, %v708
    %710 = vdwg.mxu0
    %711 = vmatpush.xpose.msra.mxu0 %v429
    %712 = vmatpush.xpose.msra.mxu0 %v413
    %713 = vmatpush.xpose.msra.mxu0 %v397
    %714 = vmatpush.xpose.msra.mxu0 %v381
    %715 = vmatpush.xpose.msra.mxu0 %v365
    %716 = vmatpush.xpose.msra.mxu0 %v349
    %717 = vmatpush.xpose.msra.mxu0 %v333
    %718 = vmatpush.xpose.msra.mxu0 %v317
    %719 = vmatpush.xpose.msra.mxu0 %v301
    %720 = vmatpush.xpose.msra.mxu0 %v285
    %721 = vmatpush.xpose.msra.mxu0 %v269
    %722 = vmatpush.xpose.msra.mxu0 %v253
    %723 = vmatpush.xpose.msra.mxu0 %v237
    %724 = vmatpush.xpose.msra.mxu0 %v221
    %725 = vmatpush.xpose.msra.mxu0 %v205
    %726 = vmatpush.xpose.msra.mxu0 %v189
    %727 = vmatmul.f32.gmra.mxu0 %v45
    %v728 = vpop.f32.mrf.mxu0
    %v729 = vadd.f32 %v709, %v728
    %730 = vdwg.mxu0
    %731 = vmatpush.xpose.msra.mxu0 %v430
    %732 = vmatpush.xpose.msra.mxu0 %v414
    %733 = vmatpush.xpose.msra.mxu0 %v398
    %734 = vmatpush.xpose.msra.mxu0 %v382
    %735 = vmatpush.xpose.msra.mxu0 %v366
    %736 = vmatpush.xpose.msra.mxu0 %v350
    %737 = vmatpush.xpose.msra.mxu0 %v334
    %738 = vmatpush.xpose.msra.mxu0 %v318
    %739 = vmatpush.xpose.msra.mxu0 %v302
    %740 = vmatpush.xpose.msra.mxu0 %v286
    %741 = vmatpush.xpose.msra.mxu0 %v270
    %742 = vmatpush.xpose.msra.mxu0 %v254
    %743 = vmatpush.xpose.msra.mxu0 %v238
    %744 = vmatpush.xpose.msra.mxu0 %v222
    %745 = vmatpush.xpose.msra.mxu0 %v206
    %746 = vmatpush.xpose.msra.mxu0 %v190
    %747 = vmatmul.f32.gmra.mxu0 %v46
    %v748 = vpop.f32.mrf.mxu0
    %v749 = vadd.f32 %v729, %v748
    %750 = vdwg.mxu0
    %v752 = vrot.slane %v749, 4
    %vm754 = vcmask 1043456
    %v755 = vsel %vm754, %v749, 0.0
    %v756 = vrot.slane %v755, 4
    %v757 = vadd.f32 %v755, %v756
    %v758 = vrot.slane %v757, 2
    %v759 = vadd.f32 %v757, %v758
    %v760 = vrot.slane %v759, 1
    %v761 = vadd.f32 %v759, %v760
    %v762 = vsel %vm754, %v752, 0.0
    %v763 = vrot.slane %v762, 4
    %v764 = vadd.f32 %v762, %v763
    %v765 = vrot.slane %v764, 2
    %v766 = vadd.f32 %v764, %v765
    %v767 = vrot.slane %v766, 1
    %v768 = vadd.f32 %v766, %v767
    %v769 = vld [vmem:[%s2] sm:$0x1]
    %v770 = vld [vmem:[%s2 + $0x1] sm:$0x1]
    %v771 = vld [vmem:[%s2 + $0x2] sm:$0x1]
    %v772 = vmul.f32 %v761, 0.25
    %v773 = vmul.f32 %v768, 0.25
    %v774 = vperm.slane %v769, 0
    %v775 = vadd.f32 %v772, %v774
    %v776 = vadd.f32 %v773, %v774
    %v779 = vrot.slane %v776, 7
    %vm780 = vcmask 1041409
    %v781 = vsel %vm780, %v779, %v775
    %vm783 = vcmask 1041408
    %v784 = vsel %vm783, %v781, 0.0
    %785 = vadd.xlane.f32.xlu0 %v784
    %v786 = vpop.xlane.xlu0 %785
    %v787 = vrcp.pop 128.0
    %v788 = vmul.f32 128.0, %v787
    %v789 = vsub.f32 1.0, %v788
    %v790 = vmul.f32 %v787, %v789
    %v791 = vadd.f32 %v787, %v790
    %vm792 = vweird.f32 %v787
    %v793 = vsel %vm792, %v787, %v791
    %v794 = vmul.f32 %v786, %v793
    %v796 = vrot.slane %v794, 1
    %v799 = vsub.f32 %v775, %v794
    %v800 = vsub.f32 %v776, %v796
    %v801 = vmul.f32 %v799, %v799
    %v802 = vmul.f32 %v800, %v800
    %v805 = vrot.slane %v802, 7
    %v806 = vsel %vm780, %v805, %v801
    %v808 = vsel %vm783, %v806, 0.0
    %809 = vadd.xlane.f32.xlu0 %v808
    %v810 = vpop.xlane.xlu0 %809
    %v811 = vmul.f32 %v810, %v793
    %v812 = vadd.f32 %v811, 1e-05
    %v813 = vrsqrt.pop %v812
    %v814 = vmul.f32 %v813, %v812
    %v815 = vmul.f32 %v814, %v813
    %v816 = vmul.f32 0.5, %v815
    %v817 = vsub.f32 1.5, %v816
    %v818 = vmul.f32 %v813, %v817
    %vm819 = vweird.f32 %v812
    %vm820 = vweird.f32 %v813
    %vm821 = vmor %vm819, %vm820
    %v822 = vsel %vm821, %v813, %v818
    %v824 = vrot.slane %v822, 1
    %v827 = vmul.f32 %v799, %v822
    %v828 = vmul.f32 %v800, %v824
    %v829 = vperm.slane %v770, 0
    %v830 = vmul.f32 %v827, %v829
    %v831 = vmul.f32 %v828, %v829
    %v832 = vperm.slane %v771, 0
    %v833 = vadd.f32 %v830, %v832
    %v834 = vadd.f32 %v831, %v832
    %v837 = vrot.slane %v834, 7
    %v838 = vsel %vm780, %v837, %v833
    %840 = vst [vmem:[#allocation5] sm:$0x3] %v838
    // Predicated region
    $region18: #{encoder_head.1} parent=1 // pred_check
      _
    $region19: #{encoder_head.1} parent=1 // pred_check_branch
      %842 = sbr.rel (0) target = $region21
    $region20: #{encoder_head.1} parent=1 // pred_region
      %844 = vsyncadd [#allocation4], 0
      %s846 = sshll.u32 [#allocation5], 4
      %s847 = int_to_ptr.vmem [resolvable:$true] %s846
      %s848 = sshll.u32 %s3, 4
      %s849 = int_to_ptr.hbm [resolvable:$true] %s848
      %851 = dma.vmem_to_hbm [thread:$0]  %s847, 32, %s849, [#allocation4]
    $region21: #{encoder_head.1} parent=1 // pred_fallthru
      _
    // Predicated region
    $region22: #{encoder_head.1} parent=1 // pred_check
      _
    $region23: #{encoder_head.1} parent=1 // pred_check_branch
      %853 = sbr.rel (0) target = $region25
    $region24: #{encoder_head.1} parent=1 // pred_region
      %855 = dma.done [#allocation4], 32
    $region25: #{encoder_head.1} parent=1 // pred_fallthru
      _
    %856 = vsyncpa [#allocation3], 1
    %857 = vsyncpa [#allocation4], 1

</llo_original>
